<compile_context>
chip_gen: v6e
topology: v6e:2x2x1
jax: 0.10.0
libtpu: 0.0.40
codegen_flags: <defaults>
</compile_context>

<pallas_src>
import functools

import jax
import jax.numpy as jnp
import numpy as np
from jax.experimental import pallas as pl
from jax.experimental.pallas import tpu as pltpu


def _gcn_kernel(x_ref, w_ref, abd_ref, b_ref, y_ref, *, K, n_chunks, chunk):
    """One (n, t) grid step.

    x_ref:   (1, C_in, L)       lane-fused input tile, L = t_tile * V
    w_ref:   (K, C_out, C_in)   bf16 conv weights
    abd_ref: (K, chunk, chunk)  bf16 block-diagonal adjacency, chunk = t_inner*V
    b_ref:   (C_out, chunk)     f32 conv bias folded through A, tiled over t_inner
    y_ref:   (1, C_out, L)      lane-fused output tile
    """
    xt = x_ref[0].astype(jnp.bfloat16)          # one bf16 cast pass over the tile
    bias = b_ref[...]                           # (C_out, chunk) f32
    outs = []
    for c in range(n_chunks):                   # static unroll (few chunks)
        x_c = xt[:, c * chunk:(c + 1) * chunk]  # (C_in, chunk) bf16, 128-aligned
        acc = bias                              # f32 accumulator, init = bias
        for k in range(K):                      # K is tiny: unrolled
            # Channel mixing on the MXU (bf16 in, f32 accumulate).
            h_k = jnp.dot(w_ref[k], x_c,
                          preferred_element_type=jnp.float32)       # (C_out, chunk)
            # Graph contraction, lane-fused via the block-diagonal adjacency:
            # contraction depth t_inner*V, no lane<->sublane relayout.
            acc = acc + jnp.dot(h_k.astype(jnp.bfloat16), abd_ref[k],
                                preferred_element_type=jnp.float32)
        outs.append(acc)
    y = outs[0] if n_chunks == 1 else jnp.concatenate(outs, axis=-1)
    y_ref[0] = y.astype(y_ref.dtype)            # single dense full-block store


def _vmem_capacity_bytes():
    try:
        cap = getattr(pltpu.get_tpu_info(), "vmem_capacity_bytes", None)
        if cap:
            return int(cap)
    except Exception:
        pass
    return 64 * 1024 * 1024  # conservative default (v7x per-TensorCore VMEM)


def _pick_t_inner(t_tile, V, max_lanes=512, target_lanes=256):
    """Chunk width for the block-diagonal graph matmul.

    Prefers chunks whose fused lane extent t_inner*V is a multiple of 128 in
    [128, max_lanes] (clean lane slices, decent MXU contraction depth)."""
    divs = [d for d in range(1, t_tile + 1) if t_tile % d == 0]
    aligned = [d for d in divs if (d * V) % 128 == 0 and d * V <= max_lanes]
    if aligned:
        return min(aligned, key=lambda d: abs(d * V - target_lanes))
    if t_tile * V <= max_lanes:
        return t_tile  # single chunk == whole tile (no in-kernel slicing)
    # TODO(synk): V incompatible with 128-lane alignment on a large tile;
    # fall back to the largest small-enough divisor (misaligned lane slices).
    small = [d for d in divs if d * V <= max_lanes]
    return max(small) if small else 1


def _pick_tiles(N, T, V, C_in, C_out, K, itemsize, *, t_tile=None, budget=None):
    """Pick (t_tile, t_inner): t_tile legal wrt the (8,128) lane rule, sized to
    the VMEM budget, preferring >= 2 parallel grid steps when N == 1."""
    if budget is None:
        budget = _vmem_capacity_bytes() // 4

    def legal(d):
        return T % d == 0 and (d == T or (d * V) % 128 == 0)

    def cost(d):
        L = d * V
        ch = _pick_t_inner(d, V) * V
        return (2 * C_in * L * itemsize        # x tile, double-buffered
                + 2 * C_out * L * itemsize     # y tile, double-buffered
                + 2 * C_in * L                 # bf16 copy of the x tile
                + 8 * C_out * L                # f32 chunk accumulators + merge
                + 4 * K * C_out * C_in         # bf16 weights (2 buffers)
                + 4 * K * ch * ch              # bf16 block-diag A (2 buffers)
                + 8 * C_out * ch               # f32 bias tile (2 buffers)
                + 8 * C_out * ch)              # per-chunk matmul temporaries

    if t_tile is not None:
        assert legal(t_tile), (t_tile, T, V)
        return t_tile, _pick_t_inner(t_tile, V)

    cands = [d for d in range(1, T + 1) if legal(d)]
    fitting = [d for d in cands if cost(d) <= budget]
    # TODO(synk): if even the smallest legal tile misses the budget, split an
    # extra grid axis over C_out / C_in instead of over-subscribing VMEM.
    pool = fitting or [min(cands)]
    if N == 1:  # keep both v7x TensorCores busy for small-batch / inference
        multi = [d for d in pool if (T // d) >= 2]
        if multi:
            pool = multi
    best = max(pool)
    return best, _pick_t_inner(best, V)


def conv_temporal_graphical(x, adj, weight, bias, *, t_tile=None):
    """x: (N, C_in, T, V); adj: (K, V, V); weight: (K, C_out, C_in);
    bias: (K, C_out).  Returns (y, adj) with y: (N, C_out, T, V)."""
    N, C_in, T, V = x.shape
    K, C_out, _ = weight.shape
    assert adj.shape == (K, V, V)
    assert weight.shape == (K, C_out, C_in)
    assert bias.shape == (K, C_out)

    vmem_cap = _vmem_capacity_bytes()
    itemsize = x.dtype.itemsize
    t_tile, t_inner = _pick_tiles(N, T, V, C_in, C_out, K, itemsize,
                                  t_tile=t_tile, budget=vmem_cap // 4)
    L = t_tile * V
    chunk = t_inner * V
    n_chunks = t_tile // t_inner

    # Lane-dense views / folded parameters (cheap wrapper-side work).
    x_fused = x.reshape(N, C_in, T * V)
    w_bf16 = weight.astype(jnp.bfloat16)                        # (K, C_out, C_in)
    # Block-diagonal adjacency: Abd[k, t*V+v, s*V+w] = (t==s) * A[k, v, w].
    eye_t = jnp.eye(t_inner, dtype=jnp.float32)
    abd = jnp.einsum('ts,kvw->ktvsw', eye_t, adj.astype(jnp.float32))
    abd = abd.reshape(K, chunk, chunk).astype(jnp.bfloat16)
    # Conv bias folded through the adjacency, pre-tiled over t_inner (f32).
    b_eff = jnp.einsum('ko,kvw->ow', bias.astype(jnp.float32),
                       adj.astype(jnp.float32))                 # (C_out, V)
    b_tile = jnp.tile(b_eff, (1, t_inner))                      # (C_out, chunk)

    flops = 2 * N * T * V * K * C_out * (C_in + V)
    bytes_accessed = (N * C_in * T * V * itemsize
                      + N * C_out * T * V * itemsize
                      + K * C_out * C_in * 2
                      + K * chunk * chunk * 2
                      + C_out * chunk * 4)

    kernel = functools.partial(_gcn_kernel, K=K, n_chunks=n_chunks, chunk=chunk)
    y_fused = pl.pallas_call(
        kernel,
        out_shape=jax.ShapeDtypeStruct((N, C_out, T * V), x.dtype),
        grid=(N, T // t_tile),
        in_specs=[
            pl.BlockSpec((1, C_in, L), lambda n, t: (n, 0, t)),
            pl.BlockSpec((K, C_out, C_in), lambda n, t: (0, 0, 0)),
            pl.BlockSpec((K, chunk, chunk), lambda n, t: (0, 0, 0)),
            pl.BlockSpec((C_out, chunk), lambda n, t: (0, 0)),
        ],
        out_specs=pl.BlockSpec((1, C_out, L), lambda n, t: (n, 0, t)),
        compiler_params=pltpu.CompilerParams(
            dimension_semantics=("parallel", "parallel"),
            vmem_limit_bytes=min(vmem_cap * 5 // 8, 64 * 1024 * 1024)),
        cost_estimate=pl.CostEstimate(flops=flops, transcendentals=0,
                                      bytes_accessed=bytes_accessed),
    )(x_fused, w_bf16, abd, b_tile)

    return y_fused.reshape(N, C_out, T, V), adj


def _ref_forward(x, adj, weight, bias):
    # Pure-JAX f32 reference mirroring the PyTorch module (defaults: 1x1 conv).
    conv = jnp.einsum('koc,nctv->nkotv', weight, x) \
        + bias[None, :, :, None, None]
    return jnp.einsum('nkotv,kvw->notw', conv, adj)


if __name__ == "__main__":
    root = jax.random.PRNGKey(0)

    def run_case(key, N, C_in, C_out, T, V, K, t_tile=None):
        k1, k2, k3, k4 = jax.random.split(key, 4)
        x = jax.random.normal(k1, (N, C_in, T, V), dtype=jnp.float32)
        adj = jax.random.normal(k2, (K, V, V), dtype=jnp.float32)
        # nn.Conv2d(C_in, C_out*K, 1) weight / bias, channel axis split (K, C_out).
        w_flat = 0.1 * jax.random.normal(k3, (C_out * K, C_in, 1, 1),
                                         dtype=jnp.float32)
        b_flat = 0.1 * jax.random.normal(k4, (C_out * K,), dtype=jnp.float32)
        weight = w_flat.reshape(K, C_out, C_in)
        bias = b_flat.reshape(K, C_out)

        y, adj_out = conv_temporal_graphical(x, adj, weight, bias, t_tile=t_tile)
        y = jax.block_until_ready(y)
        ref = _ref_forward(x, adj, weight, bias)
        # bf16 MXU path with f32 accumulation -> loose tolerance vs f32 reference.
        np.testing.assert_allclose(np.asarray(y), np.asarray(ref),
                                   rtol=5e-2, atol=5e-2)
        assert adj_out.shape == (K, V, V)

    keys = jax.random.split(root, 4)
    # Case 1: auto tile, single T step per batch, grid = (2, 1).
    run_case(keys[0], N=2, C_in=4, C_out=8, T=8, V=16, K=3)
    # Case 2: explicit T tiling -> grid = (1, 2) (>=2 parallel steps at N=1).
    run_case(keys[1], N=1, C_in=8, C_out=16, T=16, V=16, K=2, t_tile=8)
    # Case 3: exercises the in-kernel chunk loop (t_tile=32 -> chunk=256, 2 chunks).
    run_case(keys[2], N=1, C_in=8, C_out=16, T=32, V=16, K=3, t_tile=32)
    # Case 4: V=25 (unaligned lane extent), single full-T tile per batch.
    run_case(keys[3], N=2, C_in=4, C_out=8, T=4, V=25, K=2)

    print("KERNEL_OK")
</pallas_src>

<mosaic_0001>
module attributes {stable_mosaic.version = 11 : i64} {
  func.func @_gcn_kernel(%arg0: i32, %arg1: i32, %arg2: memref<1x4x128xf32, #tpu.memory_space<vmem>>, %arg3: memref<3x8x4xbf16, #tpu.memory_space<vmem>>, %arg4: memref<3x128x128xbf16, #tpu.memory_space<vmem>>, %arg5: memref<8x128xf32, #tpu.memory_space<vmem>>, %arg6: memref<1x8x128xf32, #tpu.memory_space<vmem>>) attributes {dimension_semantics = [#tpu.dimension_semantics<parallel>, #tpu.dimension_semantics<parallel>], iteration_bounds = array<i64: 2, 1>, scalar_prefetch = 0 : i64, scratch_operands = 0 : i64, tpu.core_type = #tpu.core_type<tc>, window_params = [{transform_indices = @transform_0, window_bounds = array<i64: 1, 4, 128>}, {pipeline_mode = #tpu.pipeline_mode<synchronous>, transform_indices = @transform_1, window_bounds = array<i64: 3, 8, 4>}, {pipeline_mode = #tpu.pipeline_mode<synchronous>, transform_indices = @transform_2, window_bounds = array<i64: 3, 128, 128>}, {pipeline_mode = #tpu.pipeline_mode<synchronous>, transform_indices = @transform_3, window_bounds = array<i64: 8, 128>}, {transform_indices = @transform_4, window_bounds = array<i64: 1, 8, 128>}]} {
    %c0 = arith.constant 0 : index
    %c0_0 = arith.constant 0 : index
    %c0_1 = arith.constant 0 : index
    %0 = vector.load %arg2[%c0, %c0_0, %c0_1] : memref<1x4x128xf32, #tpu.memory_space<vmem>>, vector<1x4x128xf32>
    %1 = vector.shape_cast %0 : vector<1x4x128xf32> to vector<4x128xf32>
    %2 = arith.truncf %1 : vector<4x128xf32> to vector<4x128xbf16>
    %c0_2 = arith.constant 0 : index
    %c0_3 = arith.constant 0 : index
    %3 = vector.load %arg5[%c0_2, %c0_3] : memref<8x128xf32, #tpu.memory_space<vmem>>, vector<8x128xf32>
    %c0_4 = arith.constant 0 : index
    %c0_5 = arith.constant 0 : index
    %c0_6 = arith.constant 0 : index
    %4 = vector.load %arg3[%c0_4, %c0_5, %c0_6] : memref<3x8x4xbf16, #tpu.memory_space<vmem>>, vector<1x8x4xbf16>
    %5 = vector.shape_cast %4 : vector<1x8x4xbf16> to vector<8x4xbf16>
    %cst = arith.constant dense<0.000000e+00> : vector<8x128xf32>
    %6 = tpu.matmul %5, %2, %cst {dimension_numbers = #tpu.dot_dimension_numbers<[1], [0], [0], [1], [0, 0, 1, 1], [], []>} : vector<8x4xbf16>, vector<4x128xbf16>, vector<8x128xf32> -> vector<8x128xf32>
    %7 = arith.truncf %6 : vector<8x128xf32> to vector<8x128xbf16>
    %c0_7 = arith.constant 0 : index
    %c0_8 = arith.constant 0 : index
    %c0_9 = arith.constant 0 : index
    %8 = vector.load %arg4[%c0_7, %c0_8, %c0_9] : memref<3x128x128xbf16, #tpu.memory_space<vmem>>, vector<1x128x128xbf16>
    %9 = vector.shape_cast %8 : vector<1x128x128xbf16> to vector<128x128xbf16>
    %cst_10 = arith.constant dense<0.000000e+00> : vector<8x128xf32>
    %10 = tpu.matmul %7, %9, %cst_10 {dimension_numbers = #tpu.dot_dimension_numbers<[1], [0], [0], [1], [0, 0, 1, 1], [], []>} : vector<8x128xbf16>, vector<128x128xbf16>, vector<8x128xf32> -> vector<8x128xf32>
    %11 = arith.addf %3, %10 : vector<8x128xf32>
    %c1 = arith.constant 1 : index
    %c0_11 = arith.constant 0 : index
    %c0_12 = arith.constant 0 : index
    %12 = vector.load %arg3[%c1, %c0_11, %c0_12] : memref<3x8x4xbf16, #tpu.memory_space<vmem>>, vector<1x8x4xbf16>
    %13 = vector.shape_cast %12 : vector<1x8x4xbf16> to vector<8x4xbf16>
    %cst_13 = arith.constant dense<0.000000e+00> : vector<8x128xf32>
    %14 = tpu.matmul %13, %2, %cst_13 {dimension_numbers = #tpu.dot_dimension_numbers<[1], [0], [0], [1], [0, 0, 1, 1], [], []>} : vector<8x4xbf16>, vector<4x128xbf16>, vector<8x128xf32> -> vector<8x128xf32>
    %15 = arith.truncf %14 : vector<8x128xf32> to vector<8x128xbf16>
    %c1_14 = arith.constant 1 : index
    %c0_15 = arith.constant 0 : index
    %c0_16 = arith.constant 0 : index
    %16 = vector.load %arg4[%c1_14, %c0_15, %c0_16] : memref<3x128x128xbf16, #tpu.memory_space<vmem>>, vector<1x128x128xbf16>
    %17 = vector.shape_cast %16 : vector<1x128x128xbf16> to vector<128x128xbf16>
    %cst_17 = arith.constant dense<0.000000e+00> : vector<8x128xf32>
    %18 = tpu.matmul %15, %17, %cst_17 {dimension_numbers = #tpu.dot_dimension_numbers<[1], [0], [0], [1], [0, 0, 1, 1], [], []>} : vector<8x128xbf16>, vector<128x128xbf16>, vector<8x128xf32> -> vector<8x128xf32>
    %19 = arith.addf %11, %18 : vector<8x128xf32>
    %c2 = arith.constant 2 : index
    %c0_18 = arith.constant 0 : index
    %c0_19 = arith.constant 0 : index
    %20 = vector.load %arg3[%c2, %c0_18, %c0_19] : memref<3x8x4xbf16, #tpu.memory_space<vmem>>, vector<1x8x4xbf16>
    %21 = vector.shape_cast %20 : vector<1x8x4xbf16> to vector<8x4xbf16>
    %cst_20 = arith.constant dense<0.000000e+00> : vector<8x128xf32>
    %22 = tpu.matmul %21, %2, %cst_20 {dimension_numbers = #tpu.dot_dimension_numbers<[1], [0], [0], [1], [0, 0, 1, 1], [], []>} : vector<8x4xbf16>, vector<4x128xbf16>, vector<8x128xf32> -> vector<8x128xf32>
    %23 = arith.truncf %22 : vector<8x128xf32> to vector<8x128xbf16>
    %c2_21 = arith.constant 2 : index
    %c0_22 = arith.constant 0 : index
    %c0_23 = arith.constant 0 : index
    %24 = vector.load %arg4[%c2_21, %c0_22, %c0_23] : memref<3x128x128xbf16, #tpu.memory_space<vmem>>, vector<1x128x128xbf16>
    %25 = vector.shape_cast %24 : vector<1x128x128xbf16> to vector<128x128xbf16>
    %cst_24 = arith.constant dense<0.000000e+00> : vector<8x128xf32>
    %26 = tpu.matmul %23, %25, %cst_24 {dimension_numbers = #tpu.dot_dimension_numbers<[1], [0], [0], [1], [0, 0, 1, 1], [], []>} : vector<8x128xbf16>, vector<128x128xbf16>, vector<8x128xf32> -> vector<8x128xf32>
    %27 = arith.addf %19, %26 : vector<8x128xf32>
    %c0_25 = arith.constant 0 : index
    %c0_26 = arith.constant 0 : index
    %c0_27 = arith.constant 0 : index
    %28 = vector.load %arg6[%c0_25, %c0_26, %c0_27] : memref<1x8x128xf32, #tpu.memory_space<vmem>>, vector<1x8x128xf32>
    %29 = vector.shape_cast %28 : vector<1x8x128xf32> to vector<8x128xf32>
    %30 = vector.shape_cast %27 : vector<8x128xf32> to vector<1x8x128xf32>
    tpu.vector_store %arg6[%c0_25, %c0_26, %c0_27], %30 {strides = array<i32>} : memref<1x8x128xf32, #tpu.memory_space<vmem>>, vector<1x8x128xf32>,
    return
  }
  func.func @transform_0(%arg0: i32, %arg1: i32) -> (i32, i32, i32) {
    %c0_i32 = arith.constant 0 : i32
    %c0_i32_0 = arith.constant 0 : i32
    return %arg0, %c0_i32, %arg1 : i32, i32, i32
  }
  func.func @transform_1(%arg0: i32, %arg1: i32) -> (i32, i32, i32) {
    %c0_i32 = arith.constant 0 : i32
    %c0_i32_0 = arith.constant 0 : i32
    %c0_i32_1 = arith.constant 0 : i32
    %c0_i32_2 = arith.constant 0 : i32
    return %c0_i32, %c0_i32_0, %c0_i32_1 : i32, i32, i32
  }
  func.func @transform_2(%arg0: i32, %arg1: i32) -> (i32, i32, i32) {
    %c0_i32 = arith.constant 0 : i32
    %c0_i32_0 = arith.constant 0 : i32
    %c0_i32_1 = arith.constant 0 : i32
    %c0_i32_2 = arith.constant 0 : i32
    return %c0_i32, %c0_i32_0, %c0_i32_1 : i32, i32, i32
  }
  func.func @transform_3(%arg0: i32, %arg1: i32) -> (i32, i32) {
    %c0_i32 = arith.constant 0 : i32
    %c0_i32_0 = arith.constant 0 : i32
    %c0_i32_1 = arith.constant 0 : i32
    return %c0_i32, %c0_i32_0 : i32, i32
  }
  func.func @transform_4(%arg0: i32, %arg1: i32) -> (i32, i32, i32) {
    %c0_i32 = arith.constant 0 : i32
    %c0_i32_0 = arith.constant 0 : i32
    return %arg0, %c0_i32, %arg1 : i32, i32, i32
  }
}

</mosaic_0001>

<llo_original>
// kernel: tpu_custom_call.1
$region0: #{tpu_custom_call.1}
  #allocation0 [shape = 'u32[]', space=smem, size = 0x4, offset = 0x4, fixed_abs, tag = 'smem constant byte address 0x4 - core index']
  #allocation1 [shape = 'u32[144,128]{1,0:T(1,128)}', space=vmem, size = 0x12000, scoped, tag = 'internal scratch']
  %s0 = inlined_call_operand.vmem [shape: f32[2,4,128], index: 0, kind: input, shape index: {}]
  %s1 = inlined_call_operand.vmem [shape: bf16[3,8,4], index: 1, kind: input, shape index: {}]
  %s2 = inlined_call_operand.hbm [shape: bf16[3,128,128], index: 2, kind: input, shape index: {}]
  %s3 = inlined_call_operand.vmem [shape: f32[8,128], index: 3, kind: input, shape index: {}]
  %s4 = inlined_call_operand.hbm [shape: f32[2,8,128], index: 4, kind: output, shape index: {}]
  %s5 = sld [smem:[#allocation0]]
  $region53: #{tpu_custom_call.1} parent=0
    _
  %s7 = ssub.s32 1, %s5
  %s8 = scalar_select 0, %s7, %s5
  $region1: #{tpu_custom_call.1} parent=0
    #allocation2 [shape = 'u8[98304]{0}', space=vmem, size = 0x18000, scoped, tag = 'input window, operand 2, single buffered']
    #allocation3 [shape = 's32[2]{0}', space=sflag, size = 0x8, scoped, tag = 'scoped memory for tpu_custom_call.1']
    #allocation4 [shape = 's32[2]{0}', space=sflag, size = 0x8, scoped, tag = 'scoped memory for tpu_custom_call.1']
    #allocation5 [shape = 'u8[8192]{0}', space=vmem, size = 0x2000, scoped, tag = 'output window, operand 0']
    %9 = vsyncpa [#allocation3], 0
    %10 = vsyncpa [#allocation4], 0
    %s11 = scalar_lea.sflag [#allocation4], 1
    %12 = vsyncpa %s11, 0
    loop: start=0, step=1, limit=4
    $region2: #{tpu_custom_call.1} parent=1 // loop_pre_header
      _
    $region3: #{tpu_custom_call.1} parent=1 // loop_header
      %s14 = sphi 0, %s18
      %p15 = scmp.ge.s32.totalorder %s14, 4
      %s21 = sphi 0, %s33
      %s22 = sphi 0, %s29
      %s23 = sphi 0, %s21
      %s24 = sphi 0, %s22
      %s25 = sphi 0, %s23
      %s26 = sphi 0, %s24
      %s38 = sphi 0, %s40
      %s41 = sphi 0, %s38
      %s42 = sphi 0, %s41
      %s58 = sphi 0, %s42
      %s62 = sphi 0, %s62
      %s64 = sphi 0, %s62
      %s65 = sphi 0, %s64
      %s79 = sphi 0, %s65
      %s83 = sphi 0, %s83
      %s85 = sphi 0, %s83
      %s86 = sphi 0, %s85
      %s100 = sphi 0, %s86
      %s104 = sphi 0, %s104
      %s106 = sphi 0, %s104
      %s107 = sphi 0, %s106
      %s121 = sphi 0, %s107
      %s129 = sphi 0, %s131
      %s132 = sphi 0, %s129
      %s133 = sphi 0, %s132
      %s149 = sphi 0, %s133
    $region4: #{tpu_custom_call.1} parent=1 // loop_header_branch
      %17 = sbr.rel (%p15) target = $region8
    $region5: #{tpu_custom_call.1} parent=1 // loop_body
      %s19 = ssub.s32 %s14, 1
      %s20 = ssub.s32 %s14, 2
      %s27 = sadd.s32 1, %s22
      %p28 = scmp.ge.s32.totalorder %s27, 1
      %s29 = scalar_select %p28, 0, %s27
      %s30 = sadd.s32 1, %s21
      %s31 = scalar_select %p28, %s30, %s21
      %p32 = scmp.ge.s32.totalorder %s31, 2
      %s33 = scalar_select %p32, 0, %s31
      %s34 = ssub.s32 %s21, %s33
      %s35 = ssub.s32 %s22, %s29
      %s36 = sor.u32 %s34, %s35
      %p37 = scmp.eq.s32.totalorder %s36, 0
      %s39 = sadd.s32 %s38, 1
      %s40 = scalar_select %p37, %s38, %s39
      %p43 = pneg %p37
      %p44 = scmp.eq.s32.totalorder %s14, 1
      %p45 = por %p43, %p44
      %p46 = scmp.ne.s32.totalorder %s38, %s41
      %p47 = scmp.eq.s32.totalorder %s14, 0
      %p48 = por %p46, %p47
      %p49 = scmp.ne.s32.totalorder %s38, %s41
      %p50 = scmp.eq.s32.totalorder %s19, 1
      %p51 = por %p49, %p50
      %p52 = scmp.ne.s32.totalorder %s41, %s42
      %p53 = scmp.eq.s32.totalorder %s19, 0
      %p54 = por %p52, %p53
      %p55 = scmp.ne.s32.totalorder %s41, %s42
      %p56 = scmp.eq.s32.totalorder %s20, 1
      %p57 = por %p55, %p56
      %p59 = scmp.ne.s32.totalorder %s42, %s58
      %p60 = scmp.eq.s32.totalorder %s20, 0
      %p61 = por %p59, %p60
      %s63 = sadd.s32 %s62, 1
      %p66 = scmp.eq.s32.totalorder %s14, 1
      %p67 = scmp.ne.s32.totalorder %s62, %s64
      %p68 = scmp.eq.s32.totalorder %s14, 0
      %p69 = por %p67, %p68
      %p70 = scmp.ne.s32.totalorder %s62, %s64
      %p71 = scmp.eq.s32.totalorder %s19, 1
      %p72 = por %p70, %p71
      %p73 = scmp.ne.s32.totalorder %s64, %s65
      %p74 = scmp.eq.s32.totalorder %s19, 0
      %p75 = por %p73, %p74
      %p76 = scmp.ne.s32.totalorder %s64, %s65
      %p77 = scmp.eq.s32.totalorder %s20, 1
      %p78 = por %p76, %p77
      %p80 = scmp.ne.s32.totalorder %s65, %s79
      %p81 = scmp.eq.s32.totalorder %s20, 0
      %p82 = por %p80, %p81
      %s84 = sadd.s32 %s83, 1
      %p87 = scmp.eq.s32.totalorder %s14, 1
      %p88 = scmp.ne.s32.totalorder %s83, %s85
      %p89 = scmp.eq.s32.totalorder %s14, 0
      %p90 = por %p88, %p89
      %p91 = scmp.ne.s32.totalorder %s83, %s85
      %p92 = scmp.eq.s32.totalorder %s19, 1
      %p93 = por %p91, %p92
      %p94 = scmp.ne.s32.totalorder %s85, %s86
      %p95 = scmp.eq.s32.totalorder %s19, 0
      %p96 = por %p94, %p95
      %p97 = scmp.ne.s32.totalorder %s85, %s86
      %p98 = scmp.eq.s32.totalorder %s20, 1
      %p99 = por %p97, %p98
      %p101 = scmp.ne.s32.totalorder %s86, %s100
      %p102 = scmp.eq.s32.totalorder %s20, 0
      %p103 = por %p101, %p102
      %s105 = sadd.s32 %s104, 1
      %p108 = scmp.eq.s32.totalorder %s14, 1
      %p109 = scmp.ne.s32.totalorder %s104, %s106
      %p110 = scmp.eq.s32.totalorder %s14, 0
      %p111 = por %p109, %p110
      %p112 = scmp.ne.s32.totalorder %s104, %s106
      %p113 = scmp.eq.s32.totalorder %s19, 1
      %p114 = por %p112, %p113
      %p115 = scmp.ne.s32.totalorder %s106, %s107
      %p116 = scmp.eq.s32.totalorder %s19, 0
      %p117 = por %p115, %p116
      %p118 = scmp.ne.s32.totalorder %s106, %s107
      %p119 = scmp.eq.s32.totalorder %s20, 1
      %p120 = por %p118, %p119
      %p122 = scmp.ne.s32.totalorder %s107, %s121
      %p123 = scmp.eq.s32.totalorder %s20, 0
      %p124 = por %p122, %p123
      %s125 = ssub.s32 %s21, %s33
      %s126 = ssub.s32 %s22, %s29
      %s127 = sor.u32 %s125, %s126
      %p128 = scmp.eq.s32.totalorder %s127, 0
      %s130 = sadd.s32 %s129, 1
      %s131 = scalar_select %p128, %s129, %s130
      %p134 = pneg %p128
      %p135 = scmp.eq.s32.totalorder %s14, 1
      %p136 = por %p134, %p135
      %p137 = scmp.ne.s32.totalorder %s129, %s132
      %p138 = scmp.eq.s32.totalorder %s14, 0
      %p139 = por %p137, %p138
      %p140 = scmp.ne.s32.totalorder %s129, %s132
      %p141 = scmp.eq.s32.totalorder %s19, 1
      %p142 = por %p140, %p141
      %p143 = scmp.ne.s32.totalorder %s132, %s133
      %p144 = scmp.eq.s32.totalorder %s19, 0
      %p145 = por %p143, %p144
      %p146 = scmp.ne.s32.totalorder %s132, %s133
      %p147 = scmp.eq.s32.totalorder %s20, 1
      %p148 = por %p146, %p147
      %p150 = scmp.ne.s32.totalorder %s133, %s149
      %p151 = scmp.eq.s32.totalorder %s20, 0
      %p152 = por %p150, %p151
      %p153 = scmp.le.s32.totalorder 1, %s14
      %p154 = scmp.lt.s32.totalorder %s14, 3
      %p155 = pnand %p153, %p154
      %p156 = pneg %p155
      // Predicated region
      $region9: #{tpu_custom_call.1} parent=5 // pred_check
        _
      $region10: #{tpu_custom_call.1} parent=5 // pred_check_branch
        %158 = sbr.rel (%p155) target = $region12
      $region11: #{tpu_custom_call.1} parent=5 // pred_region
        %s159 = ssub.s32 %s14, 1
        // Predicated region
        $region13: #{tpu_custom_call.1} parent=11 // pred_check
          %p160 = pneg %p75
        $region14: #{tpu_custom_call.1} parent=11 // pred_check_branch
          %162 = sbr.rel (%p160) target = $region16
        $region15: #{tpu_custom_call.1} parent=11 // pred_region
          _
        $region16: #{tpu_custom_call.1} parent=11 // pred_fallthru
          _
        // Predicated region
        $region17: #{tpu_custom_call.1} parent=11 // pred_check
          %p163 = pneg %p96
        $region18: #{tpu_custom_call.1} parent=11 // pred_check_branch
          %165 = sbr.rel (%p163) target = $region20
        $region19: #{tpu_custom_call.1} parent=11 // pred_region
          %s167 = ssub.s32 3072, 3072
          %168 = vsyncadd [#allocation3], %s167
          %s169 = sshll.u32 [#allocation2], 4
          %s170 = int_to_ptr.vmem [resolvable:$true] %s169
          %175 = dma.hbm_to_vmem [thread:$0]  %s2, 3072, %s170, [#allocation3], 64, 64, 4
        $region20: #{tpu_custom_call.1} parent=11 // pred_fallthru
          _
        // Predicated region
        $region21: #{tpu_custom_call.1} parent=11 // pred_check
          %p176 = pneg %p117
        $region22: #{tpu_custom_call.1} parent=11 // pred_check_branch
          %178 = sbr.rel (%p176) target = $region24
        $region23: #{tpu_custom_call.1} parent=11 // pred_region
          _
        $region24: #{tpu_custom_call.1} parent=11 // pred_fallthru
          _
      $region12: #{tpu_custom_call.1} parent=5 // pred_fallthru
        _
      %p179 = scmp.lt.s32.totalorder %s14, 2
      // Predicated region
      $region25: #{tpu_custom_call.1} parent=5 // pred_check
        %p180 = pneg %p179
      $region26: #{tpu_custom_call.1} parent=5 // pred_check_branch
        %182 = sbr.rel (%p180) target = $region28
      $region27: #{tpu_custom_call.1} parent=5 // pred_region
        // Predicated region
        $region29: #{tpu_custom_call.1} parent=27 // pred_check
          %p183 = pneg %p48
        $region30: #{tpu_custom_call.1} parent=27 // pred_check_branch
          %185 = sbr.rel (%p183) target = $region32
        $region31: #{tpu_custom_call.1} parent=27 // pred_region
          %p186 = scmp.lt.s32.totalorder %s21, 1
          %s187 = scalar_select %p186, %s21, 1
          %p188 = scmp.lt.s32.totalorder %s22, 0
          %s189 = scalar_select %p188, %s22, 0
          %s190 = sadd.s32 %s189, %s187
          %s191 = smul.addr %s190, 4
          %s192 = scalar_lea.vmem %s0, %s191
        $region32: #{tpu_custom_call.1} parent=27 // pred_fallthru
          _
      $region28: #{tpu_custom_call.1} parent=5 // pred_fallthru
        _
      %p193 = scmp.le.s32.totalorder 1, %s14
      %p194 = scmp.lt.s32.totalorder %s14, 3
      %p195 = pnand %p193, %p194
      %p196 = pneg %p195
      // Predicated region
      $region33: #{tpu_custom_call.1} parent=5 // pred_check
        _
      $region34: #{tpu_custom_call.1} parent=5 // pred_check_branch
        %198 = sbr.rel (%p195) target = $region36
      $region35: #{tpu_custom_call.1} parent=5 // pred_region
        %s199 = ssub.s32 %s14, 1
        // Predicated region
        $region37: #{tpu_custom_call.1} parent=35 // pred_check
          %p200 = pneg %p96
        $region38: #{tpu_custom_call.1} parent=35 // pred_check_branch
          %202 = sbr.rel (%p200) target = $region40
        $region39: #{tpu_custom_call.1} parent=35 // pred_region
          %203 = dma.done [#allocation3], 3072
        $region40: #{tpu_custom_call.1} parent=35 // pred_fallthru
          _
        %p204 = scmp.lt.s32.totalorder %s23, 1
        %s205 = scalar_select %p204, %s23, 1
        %p206 = scmp.lt.s32.totalorder %s24, 0
        %s207 = scalar_select %p206, %s24, 0
        %s208 = sadd.s32 %s207, %s205
        %s209 = smul.addr %s208, 4
        %s210 = scalar_lea.vmem %s0, %s209
        %p211 = pneg %p54
        %p212 = pneg %p51
        %p213 = pneg %p75
        %p214 = pneg %p72
        %p215 = pneg %p96
        %p216 = pneg %p93
        %p217 = pneg %p117
        %p218 = pneg %p114
        %p219 = pneg %p145
        %p220 = pneg %p142
        %s221 = sand.u32 %s132, 1
        %s222 = scalar_lea.sflag [#allocation4], %s221
        %s223 = sand.u32 %s132, 1
        %s224 = smul.addr %s223, 8
        %s225 = scalar_lea.vmem [#allocation5], %s224
        %p226 = scmp.lt.s32.totalorder %s23, 1
        %s227 = scalar_select %p226, %s23, 1
        %p228 = scmp.lt.s32.totalorder %s24, 0
        %s229 = scalar_select %p228, %s24, 0
        %s230 = sadd.s32 %s229, %s227
        %s231 = smul.addr %s230, 4
        %s232 = scalar_lea.vmem %s0, %s231
        %v234 = vld [vmem:[%s232] sm:$0xf]
        %v235 = vpack.c.bf16 %v234, %v234
        %v236 = vld [vmem:[%s3] sm:$0xff]
        %v237 = vld [vmem:[%s1] sm:$0xf]
        %vm238 = vcmask 31744
        %v240 = vsel %vm238, %v237, 0
        %vm242 = vcmask 1041408
        %v244 = vsel %vm242, %v235, 0
        %246 = vmatprep.subr.bf16.mxu0 0
        %247 = vmatpush1.bf16.msra.mxu0 0
        %248 = vmatprep.subr.bf16.mxu0 0
        %249 = vmatpush1.bf16.msra.mxu0 0
        %250 = vmatprep.subr.bf16.mxu0 0
        %251 = vmatpush1.bf16.msra.mxu0 0
        %252 = vmatprep.subr.bf16.mxu0 0
        %253 = vmatpush1.bf16.msra.mxu0 0
        %254 = vmatprep.subr.bf16.mxu0 0
        %255 = vmatpush1.bf16.msra.mxu0 0
        %256 = vmatprep.subr.bf16.mxu0 0
        %257 = vmatpush1.bf16.msra.mxu0 0
        %258 = vmatprep.subr.bf16.mxu0 0
        %259 = vmatpush1.bf16.msra.mxu0 0
        %260 = vmatprep.subr.bf16.mxu0 0
        %261 = vmatpush1.bf16.msra.mxu0 %v244
        %262 = vmatprep.subr.bf16.mxu0 0
        %263 = vmatpush2.bf16.msra.mxu0 0
        %264 = vmatprep.subr.bf16.mxu0 0
        %265 = vmatpush2.bf16.msra.mxu0 0
        %266 = vmatprep.subr.bf16.mxu0 0
        %267 = vmatpush2.bf16.msra.mxu0 0
        %268 = vmatprep.subr.bf16.mxu0 0
        %269 = vmatpush2.bf16.msra.mxu0 0
        %270 = vmatprep.subr.bf16.mxu0 0
        %271 = vmatpush2.bf16.msra.mxu0 0
        %272 = vmatprep.subr.bf16.mxu0 0
        %273 = vmatpush2.bf16.msra.mxu0 0
        %274 = vmatprep.subr.bf16.mxu0 0
        %275 = vmatpush2.bf16.msra.mxu0 0
        %276 = vmatprep.subr.bf16.mxu0 0
        %277 = vmatpush2.bf16.msra.mxu0 0
        %278 = vmatprep.mubr.bf16.mxu0 0
        %279 = vmatmul.mubr.bf16.gmra.mxu0 %v240
        %v280 = vpop.f32.mrf.mxu0
        %v281 = vadd.f32 0.0, %v280
        %v282 = vpop.f32.mrf.mxu0
        %v283 = vpop.f32.mrf.mxu0
        %v284 = vpop.f32.mrf.mxu0
        %285 = vdwg.mxu0
        %v286 = vpack.c.bf16 %v281, %v281
        %v287 = vld [vmem:[#allocation2] sm:$0xf]
        %v288 = vld [vmem:[#allocation2 + $0x4] sm:$0xf]
        %v289 = vld [vmem:[#allocation2 + $0x8] sm:$0xf]
        %v290 = vld [vmem:[#allocation2 + $0xc] sm:$0xf]
        %v291 = vld [vmem:[#allocation2 + $0x10] sm:$0xf]
        %v292 = vld [vmem:[#allocation2 + $0x14] sm:$0xf]
        %v293 = vld [vmem:[#allocation2 + $0x18] sm:$0xf]
        %v294 = vld [vmem:[#allocation2 + $0x1c] sm:$0xf]
        %v295 = vld [vmem:[#allocation2 + $0x20] sm:$0xf]
        %v296 = vld [vmem:[#allocation2 + $0x24] sm:$0xf]
        %v297 = vld [vmem:[#allocation2 + $0x28] sm:$0xf]
        %v298 = vld [vmem:[#allocation2 + $0x2c] sm:$0xf]
        %v299 = vld [vmem:[#allocation2 + $0x30] sm:$0xf]
        %v300 = vld [vmem:[#allocation2 + $0x34] sm:$0xf]
        %v301 = vld [vmem:[#allocation2 + $0x38] sm:$0xf]
        %v302 = vld [vmem:[#allocation2 + $0x3c] sm:$0xf]
        %v319 = vunpack.c.l.b16 %v287
        %v320 = vunpack.c.l.b16 %v288
        %v321 = vunpack.c.l.b16 %v289
        %v322 = vunpack.c.l.b16 %v290
        %v323 = vunpack.c.l.b16 %v291
        %v324 = vunpack.c.l.b16 %v292
        %v325 = vunpack.c.l.b16 %v293
        %v326 = vunpack.c.l.b16 %v294
        %v327 = vunpack.c.l.b16 %v295
        %v328 = vunpack.c.l.b16 %v296
        %v329 = vunpack.c.l.b16 %v297
        %v330 = vunpack.c.l.b16 %v298
        %v331 = vunpack.c.l.b16 %v299
        %v332 = vunpack.c.l.b16 %v300
        %v333 = vunpack.c.l.b16 %v301
        %v334 = vunpack.c.l.b16 %v302
        %v335 = vpack.c.b16 %v320, %v319
        %v336 = vpack.c.b16 %v322, %v321
        %v337 = vpack.c.b16 %v324, %v323
        %v338 = vpack.c.b16 %v326, %v325
        %v339 = vpack.c.b16 %v328, %v327
        %v340 = vpack.c.b16 %v330, %v329
        %v341 = vpack.c.b16 %v332, %v331
        %v342 = vpack.c.b16 %v334, %v333
        %351 = vmatprep.subr.bf16.mxu0 0
        %352 = vmatpush1.bf16.msra.mxu0 %v342
        %353 = vmatprep.subr.bf16.mxu0 0
        %354 = vmatpush1.bf16.msra.mxu0 %v341
        %355 = vmatprep.subr.bf16.mxu0 0
        %356 = vmatpush1.bf16.msra.mxu0 %v340
        %357 = vmatprep.subr.bf16.mxu0 0
        %358 = vmatpush1.bf16.msra.mxu0 %v339
        %359 = vmatprep.subr.bf16.mxu0 0
        %360 = vmatpush1.bf16.msra.mxu0 %v338
        %361 = vmatprep.subr.bf16.mxu0 0
        %362 = vmatpush1.bf16.msra.mxu0 %v337
        %363 = vmatprep.subr.bf16.mxu0 0
        %364 = vmatpush1.bf16.msra.mxu0 %v336
        %365 = vmatprep.subr.bf16.mxu0 0
        %366 = vmatpush1.bf16.msra.mxu0 %v335
        %367 = vmatprep.subr.bf16.mxu0 0
        %368 = vmatpush2.bf16.msra.mxu0 0
        %369 = vmatprep.subr.bf16.mxu0 0
        %370 = vmatpush2.bf16.msra.mxu0 0
        %371 = vmatprep.subr.bf16.mxu0 0
        %372 = vmatpush2.bf16.msra.mxu0 0
        %373 = vmatprep.subr.bf16.mxu0 0
        %374 = vmatpush2.bf16.msra.mxu0 0
        %375 = vmatprep.subr.bf16.mxu0 0
        %376 = vmatpush2.bf16.msra.mxu0 0
        %377 = vmatprep.subr.bf16.mxu0 0
        %378 = vmatpush2.bf16.msra.mxu0 0
        %379 = vmatprep.subr.bf16.mxu0 0
        %380 = vmatpush2.bf16.msra.mxu0 0
        %381 = vmatprep.subr.bf16.mxu0 0
        %382 = vmatpush2.bf16.msra.mxu0 0
        %383 = vmatprep.mubr.bf16.mxu0 0
        %384 = vmatmul.mubr.bf16.gmra.mxu0 %v286
        %v385 = vpop.f32.mrf.mxu0
        %v386 = vadd.f32 0.0, %v385
        %v387 = vpop.f32.mrf.mxu0
        %v388 = vpop.f32.mrf.mxu0
        %v389 = vpop.f32.mrf.mxu0
        %390 = vdwg.mxu0
        %v391 = vadd.f32 %v236, %v386
        %s392 = scalar_lea.vmem %s1, 4
        %v393 = vld [vmem:[%s392] sm:$0xf]
        %v395 = vsel %vm238, %v393, 0
        %397 = vmatprep.subr.bf16.mxu0 0
        %398 = vmatpush1.bf16.msra.mxu0 0
        %399 = vmatprep.subr.bf16.mxu0 0
        %400 = vmatpush1.bf16.msra.mxu0 0
        %401 = vmatprep.subr.bf16.mxu0 0
        %402 = vmatpush1.bf16.msra.mxu0 0
        %403 = vmatprep.subr.bf16.mxu0 0
        %404 = vmatpush1.bf16.msra.mxu0 0
        %405 = vmatprep.subr.bf16.mxu0 0
        %406 = vmatpush1.bf16.msra.mxu0 0
        %407 = vmatprep.subr.bf16.mxu0 0
        %408 = vmatpush1.bf16.msra.mxu0 0
        %409 = vmatprep.subr.bf16.mxu0 0
        %410 = vmatpush1.bf16.msra.mxu0 0
        %411 = vmatprep.subr.bf16.mxu0 0
        %412 = vmatpush1.bf16.msra.mxu0 %v244
        %413 = vmatprep.subr.bf16.mxu0 0
        %414 = vmatpush2.bf16.msra.mxu0 0
        %415 = vmatprep.subr.bf16.mxu0 0
        %416 = vmatpush2.bf16.msra.mxu0 0
        %417 = vmatprep.subr.bf16.mxu0 0
        %418 = vmatpush2.bf16.msra.mxu0 0
        %419 = vmatprep.subr.bf16.mxu0 0
        %420 = vmatpush2.bf16.msra.mxu0 0
        %421 = vmatprep.subr.bf16.mxu0 0
        %422 = vmatpush2.bf16.msra.mxu0 0
        %423 = vmatprep.subr.bf16.mxu0 0
        %424 = vmatpush2.bf16.msra.mxu0 0
        %425 = vmatprep.subr.bf16.mxu0 0
        %426 = vmatpush2.bf16.msra.mxu0 0
        %427 = vmatprep.subr.bf16.mxu0 0
        %428 = vmatpush2.bf16.msra.mxu0 0
        %429 = vmatprep.mubr.bf16.mxu0 0
        %430 = vmatmul.mubr.bf16.gmra.mxu0 %v395
        %v431 = vpop.f32.mrf.mxu0
        %v432 = vadd.f32 0.0, %v431
        %v433 = vpop.f32.mrf.mxu0
        %v434 = vpop.f32.mrf.mxu0
        %v435 = vpop.f32.mrf.mxu0
        %436 = vdwg.mxu0
        %v437 = vpack.c.bf16 %v432, %v432
        %s438 = scalar_lea.vmem [#allocation2], 64
        %v439 = vld [vmem:[%s438] sm:$0xf]
        %v440 = vld [vmem:[%s438 + $0x4] sm:$0xf]
        %v441 = vld [vmem:[%s438 + $0x8] sm:$0xf]
        %v442 = vld [vmem:[%s438 + $0xc] sm:$0xf]
        %v443 = vld [vmem:[%s438 + $0x10] sm:$0xf]
        %v444 = vld [vmem:[%s438 + $0x14] sm:$0xf]
        %v445 = vld [vmem:[%s438 + $0x18] sm:$0xf]
        %v446 = vld [vmem:[%s438 + $0x1c] sm:$0xf]
        %v447 = vld [vmem:[%s438 + $0x20] sm:$0xf]
        %v448 = vld [vmem:[%s438 + $0x24] sm:$0xf]
        %v449 = vld [vmem:[%s438 + $0x28] sm:$0xf]
        %v450 = vld [vmem:[%s438 + $0x2c] sm:$0xf]
        %v451 = vld [vmem:[%s438 + $0x30] sm:$0xf]
        %v452 = vld [vmem:[%s438 + $0x34] sm:$0xf]
        %v453 = vld [vmem:[%s438 + $0x38] sm:$0xf]
        %v454 = vld [vmem:[%s438 + $0x3c] sm:$0xf]
        %v471 = vunpack.c.l.b16 %v439
        %v472 = vunpack.c.l.b16 %v440
        %v473 = vunpack.c.l.b16 %v441
        %v474 = vunpack.c.l.b16 %v442
        %v475 = vunpack.c.l.b16 %v443
        %v476 = vunpack.c.l.b16 %v444
        %v477 = vunpack.c.l.b16 %v445
        %v478 = vunpack.c.l.b16 %v446
        %v479 = vunpack.c.l.b16 %v447
        %v480 = vunpack.c.l.b16 %v448
        %v481 = vunpack.c.l.b16 %v449
        %v482 = vunpack.c.l.b16 %v450
        %v483 = vunpack.c.l.b16 %v451
        %v484 = vunpack.c.l.b16 %v452
        %v485 = vunpack.c.l.b16 %v453
        %v486 = vunpack.c.l.b16 %v454
        %v487 = vpack.c.b16 %v472, %v471
        %v488 = vpack.c.b16 %v474, %v473
        %v489 = vpack.c.b16 %v476, %v475
        %v490 = vpack.c.b16 %v478, %v477
        %v491 = vpack.c.b16 %v480, %v479
        %v492 = vpack.c.b16 %v482, %v481
        %v493 = vpack.c.b16 %v484, %v483
        %v494 = vpack.c.b16 %v486, %v485
        %503 = vmatprep.subr.bf16.mxu0 0
        %504 = vmatpush1.bf16.msra.mxu0 %v494
        %505 = vmatprep.subr.bf16.mxu0 0
        %506 = vmatpush1.bf16.msra.mxu0 %v493
        %507 = vmatprep.subr.bf16.mxu0 0
        %508 = vmatpush1.bf16.msra.mxu0 %v492
        %509 = vmatprep.subr.bf16.mxu0 0
        %510 = vmatpush1.bf16.msra.mxu0 %v491
        %511 = vmatprep.subr.bf16.mxu0 0
        %512 = vmatpush1.bf16.msra.mxu0 %v490
        %513 = vmatprep.subr.bf16.mxu0 0
        %514 = vmatpush1.bf16.msra.mxu0 %v489
        %515 = vmatprep.subr.bf16.mxu0 0
        %516 = vmatpush1.bf16.msra.mxu0 %v488
        %517 = vmatprep.subr.bf16.mxu0 0
        %518 = vmatpush1.bf16.msra.mxu0 %v487
        %519 = vmatprep.subr.bf16.mxu0 0
        %520 = vmatpush2.bf16.msra.mxu0 0
        %521 = vmatprep.subr.bf16.mxu0 0
        %522 = vmatpush2.bf16.msra.mxu0 0
        %523 = vmatprep.subr.bf16.mxu0 0
        %524 = vmatpush2.bf16.msra.mxu0 0
        %525 = vmatprep.subr.bf16.mxu0 0
        %526 = vmatpush2.bf16.msra.mxu0 0
        %527 = vmatprep.subr.bf16.mxu0 0
        %528 = vmatpush2.bf16.msra.mxu0 0
        %529 = vmatprep.subr.bf16.mxu0 0
        %530 = vmatpush2.bf16.msra.mxu0 0
        %531 = vmatprep.subr.bf16.mxu0 0
        %532 = vmatpush2.bf16.msra.mxu0 0
        %533 = vmatprep.subr.bf16.mxu0 0
        %534 = vmatpush2.bf16.msra.mxu0 0
        %535 = vmatprep.mubr.bf16.mxu0 0
        %536 = vmatmul.mubr.bf16.gmra.mxu0 %v437
        %v537 = vpop.f32.mrf.mxu0
        %v538 = vadd.f32 0.0, %v537
        %v539 = vpop.f32.mrf.mxu0
        %v540 = vpop.f32.mrf.mxu0
        %v541 = vpop.f32.mrf.mxu0
        %542 = vdwg.mxu0
        %v543 = vadd.f32 %v391, %v538
        %s544 = scalar_lea.vmem %s1, 8
        %v545 = vld [vmem:[%s544] sm:$0xf]
        %v547 = vsel %vm238, %v545, 0
        %549 = vmatprep.subr.bf16.mxu0 0
        %550 = vmatpush1.bf16.msra.mxu0 0
        %551 = vmatprep.subr.bf16.mxu0 0
        %552 = vmatpush1.bf16.msra.mxu0 0
        %553 = vmatprep.subr.bf16.mxu0 0
        %554 = vmatpush1.bf16.msra.mxu0 0
        %555 = vmatprep.subr.bf16.mxu0 0
        %556 = vmatpush1.bf16.msra.mxu0 0
        %557 = vmatprep.subr.bf16.mxu0 0
        %558 = vmatpush1.bf16.msra.mxu0 0
        %559 = vmatprep.subr.bf16.mxu0 0
        %560 = vmatpush1.bf16.msra.mxu0 0
        %561 = vmatprep.subr.bf16.mxu0 0
        %562 = vmatpush1.bf16.msra.mxu0 0
        %563 = vmatprep.subr.bf16.mxu0 0
        %564 = vmatpush1.bf16.msra.mxu0 %v244
        %565 = vmatprep.subr.bf16.mxu0 0
        %566 = vmatpush2.bf16.msra.mxu0 0
        %567 = vmatprep.subr.bf16.mxu0 0
        %568 = vmatpush2.bf16.msra.mxu0 0
        %569 = vmatprep.subr.bf16.mxu0 0
        %570 = vmatpush2.bf16.msra.mxu0 0
        %571 = vmatprep.subr.bf16.mxu0 0
        %572 = vmatpush2.bf16.msra.mxu0 0
        %573 = vmatprep.subr.bf16.mxu0 0
        %574 = vmatpush2.bf16.msra.mxu0 0
        %575 = vmatprep.subr.bf16.mxu0 0
        %576 = vmatpush2.bf16.msra.mxu0 0
        %577 = vmatprep.subr.bf16.mxu0 0
        %578 = vmatpush2.bf16.msra.mxu0 0
        %579 = vmatprep.subr.bf16.mxu0 0
        %580 = vmatpush2.bf16.msra.mxu0 0
        %581 = vmatprep.mubr.bf16.mxu0 0
        %582 = vmatmul.mubr.bf16.gmra.mxu0 %v547
        %v583 = vpop.f32.mrf.mxu0
        %v584 = vadd.f32 0.0, %v583
        %v585 = vpop.f32.mrf.mxu0
        %v586 = vpop.f32.mrf.mxu0
        %v587 = vpop.f32.mrf.mxu0
        %588 = vdwg.mxu0
        %v589 = vpack.c.bf16 %v584, %v584
        %s590 = scalar_lea.vmem [#allocation2], 128
        %v591 = vld [vmem:[%s590] sm:$0xf]
        %v592 = vld [vmem:[%s590 + $0x4] sm:$0xf]
        %v593 = vld [vmem:[%s590 + $0x8] sm:$0xf]
        %v594 = vld [vmem:[%s590 + $0xc] sm:$0xf]
        %v595 = vld [vmem:[%s590 + $0x10] sm:$0xf]
        %v596 = vld [vmem:[%s590 + $0x14] sm:$0xf]
        %v597 = vld [vmem:[%s590 + $0x18] sm:$0xf]
        %v598 = vld [vmem:[%s590 + $0x1c] sm:$0xf]
        %v599 = vld [vmem:[%s590 + $0x20] sm:$0xf]
        %v600 = vld [vmem:[%s590 + $0x24] sm:$0xf]
        %v601 = vld [vmem:[%s590 + $0x28] sm:$0xf]
        %v602 = vld [vmem:[%s590 + $0x2c] sm:$0xf]
        %v603 = vld [vmem:[%s590 + $0x30] sm:$0xf]
        %v604 = vld [vmem:[%s590 + $0x34] sm:$0xf]
        %v605 = vld [vmem:[%s590 + $0x38] sm:$0xf]
        %v606 = vld [vmem:[%s590 + $0x3c] sm:$0xf]
        %v623 = vunpack.c.l.b16 %v591
        %v624 = vunpack.c.l.b16 %v592
        %v625 = vunpack.c.l.b16 %v593
        %v626 = vunpack.c.l.b16 %v594
        %v627 = vunpack.c.l.b16 %v595
        %v628 = vunpack.c.l.b16 %v596
        %v629 = vunpack.c.l.b16 %v597
        %v630 = vunpack.c.l.b16 %v598
        %v631 = vunpack.c.l.b16 %v599
        %v632 = vunpack.c.l.b16 %v600
        %v633 = vunpack.c.l.b16 %v601
        %v634 = vunpack.c.l.b16 %v602
        %v635 = vunpack.c.l.b16 %v603
        %v636 = vunpack.c.l.b16 %v604
        %v637 = vunpack.c.l.b16 %v605
        %v638 = vunpack.c.l.b16 %v606
        %v639 = vpack.c.b16 %v624, %v623
        %v640 = vpack.c.b16 %v626, %v625
        %v641 = vpack.c.b16 %v628, %v627
        %v642 = vpack.c.b16 %v630, %v629
        %v643 = vpack.c.b16 %v632, %v631
        %v644 = vpack.c.b16 %v634, %v633
        %v645 = vpack.c.b16 %v636, %v635
        %v646 = vpack.c.b16 %v638, %v637
        %655 = vmatprep.subr.bf16.mxu0 0
        %656 = vmatpush1.bf16.msra.mxu0 %v646
        %657 = vmatprep.subr.bf16.mxu0 0
        %658 = vmatpush1.bf16.msra.mxu0 %v645
        %659 = vmatprep.subr.bf16.mxu0 0
        %660 = vmatpush1.bf16.msra.mxu0 %v644
        %661 = vmatprep.subr.bf16.mxu0 0
        %662 = vmatpush1.bf16.msra.mxu0 %v643
        %663 = vmatprep.subr.bf16.mxu0 0
        %664 = vmatpush1.bf16.msra.mxu0 %v642
        %665 = vmatprep.subr.bf16.mxu0 0
        %666 = vmatpush1.bf16.msra.mxu0 %v641
        %667 = vmatprep.subr.bf16.mxu0 0
        %668 = vmatpush1.bf16.msra.mxu0 %v640
        %669 = vmatprep.subr.bf16.mxu0 0
        %670 = vmatpush1.bf16.msra.mxu0 %v639
        %671 = vmatprep.subr.bf16.mxu0 0
        %672 = vmatpush2.bf16.msra.mxu0 0
        %673 = vmatprep.subr.bf16.mxu0 0
        %674 = vmatpush2.bf16.msra.mxu0 0
        %675 = vmatprep.subr.bf16.mxu0 0
        %676 = vmatpush2.bf16.msra.mxu0 0
        %677 = vmatprep.subr.bf16.mxu0 0
        %678 = vmatpush2.bf16.msra.mxu0 0
        %679 = vmatprep.subr.bf16.mxu0 0
        %680 = vmatpush2.bf16.msra.mxu0 0
        %681 = vmatprep.subr.bf16.mxu0 0
        %682 = vmatpush2.bf16.msra.mxu0 0
        %683 = vmatprep.subr.bf16.mxu0 0
        %684 = vmatpush2.bf16.msra.mxu0 0
        %685 = vmatprep.subr.bf16.mxu0 0
        %686 = vmatpush2.bf16.msra.mxu0 0
        %687 = vmatprep.mubr.bf16.mxu0 0
        %688 = vmatmul.mubr.bf16.gmra.mxu0 %v589
        %v689 = vpop.f32.mrf.mxu0
        %v690 = vadd.f32 0.0, %v689
        %v691 = vpop.f32.mrf.mxu0
        %v692 = vpop.f32.mrf.mxu0
        %v693 = vpop.f32.mrf.mxu0
        %694 = vdwg.mxu0
        %v695 = vadd.f32 %v543, %v690
        %696 = vst [vmem:[%s225] sm:$0xff] %v695
        %s697 = sand.u32 %s132, 1
        %s698 = scalar_lea.sflag [#allocation4], %s697
        %s699 = sand.u32 %s132, 1
        %s700 = smul.addr %s699, 8
        %s701 = scalar_lea.vmem [#allocation5], %s700
        // Predicated region
        $region41: #{tpu_custom_call.1} parent=35 // pred_check
          %p702 = pneg %p142
        $region42: #{tpu_custom_call.1} parent=35 // pred_check_branch
          %704 = sbr.rel (%p702) target = $region44
        $region43: #{tpu_custom_call.1} parent=35 // pred_region
          %s706 = ssub.s32 128, 128
          %707 = vsyncadd %s698, %s706
          %s708 = sadd.s32 %s24, %s23
          %s709 = smul.addr %s708, 128
          %s710 = scalar_lea.hbm %s4, %s709
          %s712 = sshll.u32 %s701, 4
          %s713 = int_to_ptr.vmem [resolvable:$true] %s712
          %715 = dma.vmem_to_hbm [thread:$0]  %s713, 128, %s710, %s698
        $region44: #{tpu_custom_call.1} parent=35 // pred_fallthru
          _
      $region36: #{tpu_custom_call.1} parent=5 // pred_fallthru
        _
      %p716 = scmp.le.s32.totalorder 2, %s14
      // Predicated region
      $region45: #{tpu_custom_call.1} parent=5 // pred_check
        %p717 = pneg %p716
      $region46: #{tpu_custom_call.1} parent=5 // pred_check_branch
        %719 = sbr.rel (%p717) target = $region48
      $region47: #{tpu_custom_call.1} parent=5 // pred_region
        %s720 = ssub.s32 %s14, 2
        // Predicated region
        $region49: #{tpu_custom_call.1} parent=47 // pred_check
          %p721 = pneg %p148
        $region50: #{tpu_custom_call.1} parent=47 // pred_check_branch
          %723 = sbr.rel (%p721) target = $region52
        $region51: #{tpu_custom_call.1} parent=47 // pred_region
          %s724 = sand.u32 %s133, 1
          %s725 = scalar_lea.sflag [#allocation4], %s724
          %s726 = sand.u32 %s133, 1
          %s727 = smul.addr %s726, 8
          %s728 = scalar_lea.vmem [#allocation5], %s727
          %729 = dma.done %s725, 128
        $region52: #{tpu_custom_call.1} parent=47 // pred_fallthru
          _
      $region48: #{tpu_custom_call.1} parent=5 // pred_fallthru
        _
    $region6: #{tpu_custom_call.1} parent=1 // loop_footer
      %s18 = sadd.s32 1, %s14
    $region7: #{tpu_custom_call.1} parent=1 // loop_footer_branch
      %13 = sbr.rel target = $region3
    $region8: #{tpu_custom_call.1} parent=1 // loop_exit
      _
    %730 = vsyncpa [#allocation3], 1
    %s731 = scalar_lea.sflag [#allocation3], 1
    %732 = vsyncpa %s731, 1
    %733 = vsyncpa [#allocation4], 1
    %s734 = scalar_lea.sflag [#allocation4], 1
    %735 = vsyncpa %s734, 1

</llo_original>
